<compile_context>
chip_gen: v5e
topology: v5e:2x2
jax: 0.10.0
libtpu: 0.0.40
codegen_flags: <defaults>
</compile_context>

<pallas_src>
import functools

import jax
import jax.numpy as jnp
from jax.experimental import pallas as pl
from jax.experimental.pallas import tpu as pltpu

LANES = 128  # lane width of a vreg


def _round_up(x, m):
    return ((x + m - 1) // m) * m


def _mlp_kernel(x_ref, w1_ref, b1_ref, w2_ref, b2_ref, w3_ref, b3_ref, o_ref):
    # Fused 3-layer MLP: bf16 MXU operands, f32 accumulation, f32 bias-add /
    # ReLU epilogue on the VPU, all in VMEM.  x arrives as f32 and is cast
    # in-kernel (the cast is hidden under the pipelined DMA, not a separate
    # XLA pass over HBM).
    x = x_ref[...].astype(jnp.bfloat16)  # (TB, n_in)

    h1 = jnp.dot(x, w1_ref[...], preferred_element_type=jnp.float32) + b1_ref[...]
    h1 = jnp.maximum(h1, 0.0).astype(jnp.bfloat16)

    h2 = jnp.dot(h1, w2_ref[...], preferred_element_type=jnp.float32) + b2_ref[...]
    h2 = jnp.maximum(h2, 0.0).astype(jnp.bfloat16)

    out = jnp.dot(h2, w3_ref[...], preferred_element_type=jnp.float32) + b3_ref[...]
    o_ref[...] = out.astype(o_ref.dtype)  # (TB, n_output) — unpadded store


@functools.partial(jax.jit, static_argnames=("tb",))
def generic_network_forward(x, params, *, tb=2048):
    """x: (B, n_input) float32. params: bf16 weights (hidden padded to 128
    lanes, output dim unpadded) / f32 biases. Returns (B, n_output) float32."""
    w1, b1 = params["w1"], params["b1"]
    w2, b2 = params["w2"], params["b2"]
    w3, b3 = params["w3"], params["b3"]

    B, n_input = x.shape
    h_pad = w1.shape[1]
    n_output = w3.shape[1]

    # --- Batch tiling: minimize padding, keep TB a multiple of 8 -----------
    tb8 = max(8, _round_up(tb, 8))
    B8 = _round_up(B, 8)
    TB0 = min(tb8, B8)
    grid_n = pl.cdiv(B8, TB0)
    if B8 >= 16:
        grid_n = max(grid_n, 2)  # >=2 grid steps -> both v7x TensorCores busy
    TB = _round_up(pl.cdiv(B8, grid_n), 8)  # re-balance: <=7 rows of padding
    B_pad = grid_n * TB
    if B_pad != B:
        x = jnp.pad(x, ((0, B_pad - B), (0, 0)))

    # --- VMEM budget (everything is default double-buffered) ---------------
    weight_bytes = (w1.size + w2.size + w3.size) * 2 + (b1.size + b2.size + b3.size) * 4
    tile_bytes = TB * n_input * 4 + TB * n_output * 4
    need = 2 * (weight_bytes + tile_bytes)
    vmem_limit = int(min(48 << 20, max(2 * need + (4 << 20), 16 << 20)))

    flops = 2 * B_pad * (n_input * h_pad + h_pad * h_pad + h_pad * n_output)
    bytes_accessed = int(x.size * 4 + B_pad * n_output * 4 + weight_bytes)

    # Weights/biases: constant index_map -> VMEM-resident across grid steps.
    resident = lambda a: pl.BlockSpec(a.shape, lambda i: (0, 0))

    out = pl.pallas_call(
        _mlp_kernel,
        out_shape=jax.ShapeDtypeStruct((B_pad, n_output), jnp.float32),
        grid=(grid_n,),
        in_specs=[
            pl.BlockSpec((TB, n_input), lambda i: (i, 0)),  # x: tiled over rows
            resident(w1), resident(b1),
            resident(w2), resident(b2),
            resident(w3), resident(b3),
        ],
        out_specs=pl.BlockSpec((TB, n_output), lambda i: (i, 0)),
        compiler_params=pltpu.CompilerParams(
            dimension_semantics=("parallel",),  # megacore sharding on v7x
            vmem_limit_bytes=vmem_limit,
        ),
        cost_estimate=pl.CostEstimate(
            flops=flops, transcendentals=0, bytes_accessed=bytes_accessed
        ),
    )(x, w1, b1, w2, b2, w3, b3)

    # Only batch padding (<= 7 rows) to strip; output lanes are already exact.
    return out[:B]


def init_params(key, n_input, n_hidden, n_output):
    """PyTorch nn.Linear default init: U(-1/sqrt(fan_in), 1/sqrt(fan_in)) for
    weight and bias. Weights stored (in, out) = transpose of PyTorch's
    (out, in). Hidden dims zero-padded to 128 lanes (keeps math identical);
    the final output dim is left unpadded so the kernel stores exactly
    n_output columns. Weights bf16, biases f32."""
    ks = jax.random.split(key, 6)
    h_pad = _round_up(n_hidden, LANES)

    def linear(kw, kb, fan_in, fan_out, pad_in, pad_out):
        bound = 1.0 / jnp.sqrt(jnp.float32(fan_in))
        w = jax.random.uniform(kw, (fan_in, fan_out), jnp.float32, -bound, bound)
        b = jax.random.uniform(kb, (1, fan_out), jnp.float32, -bound, bound)
        w = jnp.pad(w, ((0, pad_in - fan_in), (0, pad_out - fan_out)))
        b = jnp.pad(b, ((0, 0), (0, pad_out - fan_out)))
        return w.astype(jnp.bfloat16), b

    w1, b1 = linear(ks[0], ks[1], n_input, n_hidden, n_input, h_pad)
    w2, b2 = linear(ks[2], ks[3], n_hidden, n_hidden, h_pad, h_pad)
    w3, b3 = linear(ks[4], ks[5], n_hidden, n_output, h_pad, n_output)
    return {"w1": w1, "b1": b1, "w2": w2, "b2": b2, "w3": w3, "b3": b3}


def _reference_forward(x, p):
    # Mirrors the kernel's numerics (bf16 operands, f32 accumulate/epilogue).
    xb = x.astype(jnp.bfloat16).astype(jnp.float32)
    w1 = p["w1"].astype(jnp.float32)
    w2 = p["w2"].astype(jnp.float32)
    w3 = p["w3"].astype(jnp.float32)
    h1 = jnp.maximum(xb @ w1 + p["b1"], 0.0)
    h1 = h1.astype(jnp.bfloat16).astype(jnp.float32)
    h2 = jnp.maximum(h1 @ w2 + p["b2"], 0.0)
    h2 = h2.astype(jnp.bfloat16).astype(jnp.float32)
    return h2 @ w3 + p["b3"]


if __name__ == "__main__":
    n_input, n_hidden, n_output = 4, 32, 2
    batch = 8

    key = jax.random.PRNGKey(0)
    k_params, k_x = jax.random.split(key)
    params = init_params(k_params, n_input, n_hidden, n_output)
    x = jax.random.normal(k_x, (batch, n_input), jnp.float32)

    out = generic_network_forward(x, params)
    out = jax.block_until_ready(out)

    ref = _reference_forward(x, params)
    assert out.shape == (batch, n_output), out.shape
    assert jnp.allclose(out, ref, atol=1e-2, rtol=1e-2), "mismatch vs reference"

    print("KERNEL_OK")
</pallas_src>

<mosaic_0001>
module attributes {stable_mosaic.version = 11 : i64} {
  func.func @_mlp_kernel(%arg0: i32, %arg1: memref<8x4xf32, #tpu.memory_space<vmem>>, %arg2: memref<4x128xbf16, #tpu.memory_space<vmem>>, %arg3: memref<1x128xf32, #tpu.memory_space<vmem>>, %arg4: memref<128x128xbf16, #tpu.memory_space<vmem>>, %arg5: memref<1x128xf32, #tpu.memory_space<vmem>>, %arg6: memref<128x2xbf16, #tpu.memory_space<vmem>>, %arg7: memref<1x2xf32, #tpu.memory_space<vmem>>, %arg8: memref<8x2xf32, #tpu.memory_space<vmem>>) attributes {dimension_semantics = [#tpu.dimension_semantics<parallel>], iteration_bounds = array<i64: 1>, scalar_prefetch = 0 : i64, scratch_operands = 0 : i64, tpu.core_type = #tpu.core_type<tc>, window_params = [{transform_indices = @transform_0, window_bounds = array<i64: 8, 4>}, {pipeline_mode = #tpu.pipeline_mode<synchronous>, transform_indices = @transform_1, window_bounds = array<i64: 4, 128>}, {pipeline_mode = #tpu.pipeline_mode<synchronous>, transform_indices = @transform_2, window_bounds = array<i64: 1, 128>}, {pipeline_mode = #tpu.pipeline_mode<synchronous>, transform_indices = @transform_3, window_bounds = array<i64: 128, 128>}, {pipeline_mode = #tpu.pipeline_mode<synchronous>, transform_indices = @transform_4, window_bounds = array<i64: 1, 128>}, {pipeline_mode = #tpu.pipeline_mode<synchronous>, transform_indices = @transform_5, window_bounds = array<i64: 128, 2>}, {pipeline_mode = #tpu.pipeline_mode<synchronous>, transform_indices = @transform_6, window_bounds = array<i64: 1, 2>}, {transform_indices = @transform_7, window_bounds = array<i64: 8, 2>}]} {
    %c0 = arith.constant 0 : index
    %c0_0 = arith.constant 0 : index
    %0 = vector.load %arg1[%c0, %c0_0] : memref<8x4xf32, #tpu.memory_space<vmem>>, vector<8x4xf32>
    %1 = arith.truncf %0 : vector<8x4xf32> to vector<8x4xbf16>
    %c0_1 = arith.constant 0 : index
    %c0_2 = arith.constant 0 : index
    %2 = vector.load %arg2[%c0_1, %c0_2] : memref<4x128xbf16, #tpu.memory_space<vmem>>, vector<4x128xbf16>
    %cst = arith.constant dense<0.000000e+00> : vector<8x128xf32>
    %3 = tpu.matmul %1, %2, %cst {dimension_numbers = #tpu.dot_dimension_numbers<[1], [0], [0], [1], [0, 0, 1, 1], [], []>} : vector<8x4xbf16>, vector<4x128xbf16>, vector<8x128xf32> -> vector<8x128xf32>
    %c0_3 = arith.constant 0 : index
    %c0_4 = arith.constant 0 : index
    %4 = vector.load %arg3[%c0_3, %c0_4] : memref<1x128xf32, #tpu.memory_space<vmem>>, vector<1x128xf32>
    %5 = vector.broadcast %4 : vector<1x128xf32> to vector<8x128xf32>
    %6 = arith.addf %3, %5 : vector<8x128xf32>
    %cst_5 = arith.constant 0.000000e+00 : f32
    %7 = vector.broadcast %cst_5 : f32 to vector<8x128xf32>
    %8 = arith.maximumf %6, %7 : vector<8x128xf32>
    %9 = arith.truncf %8 : vector<8x128xf32> to vector<8x128xbf16>
    %c0_6 = arith.constant 0 : index
    %c0_7 = arith.constant 0 : index
    %10 = vector.load %arg4[%c0_6, %c0_7] : memref<128x128xbf16, #tpu.memory_space<vmem>>, vector<128x128xbf16>
    %cst_8 = arith.constant dense<0.000000e+00> : vector<8x128xf32>
    %11 = tpu.matmul %9, %10, %cst_8 {dimension_numbers = #tpu.dot_dimension_numbers<[1], [0], [0], [1], [0, 0, 1, 1], [], []>} : vector<8x128xbf16>, vector<128x128xbf16>, vector<8x128xf32> -> vector<8x128xf32>
    %c0_9 = arith.constant 0 : index
    %c0_10 = arith.constant 0 : index
    %12 = vector.load %arg5[%c0_9, %c0_10] : memref<1x128xf32, #tpu.memory_space<vmem>>, vector<1x128xf32>
    %13 = vector.broadcast %12 : vector<1x128xf32> to vector<8x128xf32>
    %14 = arith.addf %11, %13 : vector<8x128xf32>
    %cst_11 = arith.constant 0.000000e+00 : f32
    %15 = vector.broadcast %cst_11 : f32 to vector<8x128xf32>
    %16 = arith.maximumf %14, %15 : vector<8x128xf32>
    %17 = arith.truncf %16 : vector<8x128xf32> to vector<8x128xbf16>
    %c0_12 = arith.constant 0 : index
    %c0_13 = arith.constant 0 : index
    %18 = vector.load %arg6[%c0_12, %c0_13] : memref<128x2xbf16, #tpu.memory_space<vmem>>, vector<128x2xbf16>
    %cst_14 = arith.constant dense<0.000000e+00> : vector<8x2xf32>
    %19 = tpu.matmul %17, %18, %cst_14 {dimension_numbers = #tpu.dot_dimension_numbers<[1], [0], [0], [1], [0, 0, 1, 1], [], []>} : vector<8x128xbf16>, vector<128x2xbf16>, vector<8x2xf32> -> vector<8x2xf32>
    %c0_15 = arith.constant 0 : index
    %c0_16 = arith.constant 0 : index
    %20 = vector.load %arg7[%c0_15, %c0_16] : memref<1x2xf32, #tpu.memory_space<vmem>>, vector<1x2xf32>
    %21 = vector.broadcast %20 : vector<1x2xf32> to vector<8x2xf32>
    %22 = arith.addf %19, %21 : vector<8x2xf32>
    %c0_17 = arith.constant 0 : index
    %c0_18 = arith.constant 0 : index
    %23 = vector.load %arg8[%c0_17, %c0_18] : memref<8x2xf32, #tpu.memory_space<vmem>>, vector<8x2xf32>
    tpu.vector_store %arg8[%c0_17, %c0_18], %22 {strides = array<i32>} : memref<8x2xf32, #tpu.memory_space<vmem>>, vector<8x2xf32>,
    return
  }
  func.func @transform_0(%arg0: i32) -> (i32, i32) {
    %c0_i32 = arith.constant 0 : i32
    %c0_i32_0 = arith.constant 0 : i32
    return %arg0, %c0_i32 : i32, i32
  }
  func.func @transform_1(%arg0: i32) -> (i32, i32) {
    %c0_i32 = arith.constant 0 : i32
    %c0_i32_0 = arith.constant 0 : i32
    %c0_i32_1 = arith.constant 0 : i32
    return %c0_i32, %c0_i32_0 : i32, i32
  }
  func.func @transform_2(%arg0: i32) -> (i32, i32) {
    %c0_i32 = arith.constant 0 : i32
    %c0_i32_0 = arith.constant 0 : i32
    %c0_i32_1 = arith.constant 0 : i32
    return %c0_i32, %c0_i32_0 : i32, i32
  }
  func.func @transform_3(%arg0: i32) -> (i32, i32) {
    %c0_i32 = arith.constant 0 : i32
    %c0_i32_0 = arith.constant 0 : i32
    %c0_i32_1 = arith.constant 0 : i32
    return %c0_i32, %c0_i32_0 : i32, i32
  }
  func.func @transform_4(%arg0: i32) -> (i32, i32) {
    %c0_i32 = arith.constant 0 : i32
    %c0_i32_0 = arith.constant 0 : i32
    %c0_i32_1 = arith.constant 0 : i32
    return %c0_i32, %c0_i32_0 : i32, i32
  }
  func.func @transform_5(%arg0: i32) -> (i32, i32) {
    %c0_i32 = arith.constant 0 : i32
    %c0_i32_0 = arith.constant 0 : i32
    %c0_i32_1 = arith.constant 0 : i32
    return %c0_i32, %c0_i32_0 : i32, i32
  }
  func.func @transform_6(%arg0: i32) -> (i32, i32) {
    %c0_i32 = arith.constant 0 : i32
    %c0_i32_0 = arith.constant 0 : i32
    %c0_i32_1 = arith.constant 0 : i32
    return %c0_i32, %c0_i32_0 : i32, i32
  }
  func.func @transform_7(%arg0: i32) -> (i32, i32) {
    %c0_i32 = arith.constant 0 : i32
    %c0_i32_0 = arith.constant 0 : i32
    return %arg0, %c0_i32 : i32, i32
  }
}

</mosaic_0001>

<llo_original>
// kernel: generic_network_forward.1
$region0: #{generic_network_forward.1}
  #allocation0 [shape = 'u32[]', space=smem, size = 0x4, offset = 0x4, fixed_abs, tag = 'smem constant byte address 0x4 - core index']
  #allocation1 [shape = 'u32[72,128]{1,0:T(1,128)}', space=vmem, size = 0x9000, scoped, tag = 'internal scratch']
  %s0 = inlined_call_operand.vmem [shape: f32[8,4], index: 0, kind: input, shape index: {}]
  %s1 = inlined_call_operand.vmem [shape: bf16[4,128], index: 1, kind: input, shape index: {}]
  %s2 = inlined_call_operand.vmem [shape: f32[1,128], index: 2, kind: input, shape index: {}]
  %s3 = inlined_call_operand.vmem [shape: bf16[128,128], index: 3, kind: input, shape index: {}]
  %s4 = inlined_call_operand.vmem [shape: f32[1,128], index: 4, kind: input, shape index: {}]
  %s5 = inlined_call_operand.vmem [shape: bf16[128,2], index: 5, kind: input, shape index: {}]
  %s6 = inlined_call_operand.vmem [shape: f32[1,2], index: 6, kind: input, shape index: {}]
  %s7 = inlined_call_operand.vmem [shape: f32[8,2], index: 7, kind: output, shape index: {}]
  %s8 = sld [smem:[#allocation0]]
  $region38: #{generic_network_forward.1} parent=0
    _
  %s10 = ssub.s32 1, %s8
  %s11 = scalar_select 0, %s10, %s8
  // Predicated region
  $region2: #{generic_network_forward.1} parent=0 // pred_check
    _
  $region3: #{generic_network_forward.1} parent=0 // pred_check_branch
    %13 = sbr.rel (0) target = $region5
  $region4: #{generic_network_forward.1} parent=0 // pred_region
    _
  $region5: #{generic_network_forward.1} parent=0 // pred_fallthru
    _
  // Predicated region
  $region6: #{generic_network_forward.1} parent=0 // pred_check
    _
  $region7: #{generic_network_forward.1} parent=0 // pred_check_branch
    %15 = sbr.rel (0) target = $region9
  $region8: #{generic_network_forward.1} parent=0 // pred_region
    _
  $region9: #{generic_network_forward.1} parent=0 // pred_fallthru
    _
  // Predicated region
  $region10: #{generic_network_forward.1} parent=0 // pred_check
    _
  $region11: #{generic_network_forward.1} parent=0 // pred_check_branch
    %17 = sbr.rel (0) target = $region13
  $region12: #{generic_network_forward.1} parent=0 // pred_region
    _
  $region13: #{generic_network_forward.1} parent=0 // pred_fallthru
    _
  // Predicated region
  $region14: #{generic_network_forward.1} parent=0 // pred_check
    _
  $region15: #{generic_network_forward.1} parent=0 // pred_check_branch
    %19 = sbr.rel (0) target = $region17
  $region16: #{generic_network_forward.1} parent=0 // pred_region
    _
  $region17: #{generic_network_forward.1} parent=0 // pred_fallthru
    _
  // Predicated region
  $region18: #{generic_network_forward.1} parent=0 // pred_check
    _
  $region19: #{generic_network_forward.1} parent=0 // pred_check_branch
    %21 = sbr.rel (0) target = $region21
  $region20: #{generic_network_forward.1} parent=0 // pred_region
    _
  $region21: #{generic_network_forward.1} parent=0 // pred_fallthru
    _
  // Predicated region
  $region22: #{generic_network_forward.1} parent=0 // pred_check
    _
  $region23: #{generic_network_forward.1} parent=0 // pred_check_branch
    %23 = sbr.rel (0) target = $region25
  $region24: #{generic_network_forward.1} parent=0 // pred_region
    _
  $region25: #{generic_network_forward.1} parent=0 // pred_fallthru
    _
  // Predicated region
  $region26: #{generic_network_forward.1} parent=0 // pred_check
    _
  $region27: #{generic_network_forward.1} parent=0 // pred_check_branch
    %25 = sbr.rel (0) target = $region29
  $region28: #{generic_network_forward.1} parent=0 // pred_region
    _
  $region29: #{generic_network_forward.1} parent=0 // pred_fallthru
    _
  %v27 = vld [vmem:[%s0] sm:$0xff]
  %v28 = vpack.c.bf16 %v27, %v27
  %v29 = vld [vmem:[%s1] sm:$0x3]
  %v30 = vld [vmem:[%s2] sm:$0x1]
  %v32 = vperm.slane %v30, 0
  %vm34 = vcmask 31744
  %v36 = vsel %vm34, %v28, 0
  %vm38 = vcmask 1041408
  %v40 = vsel %vm38, %v29, 0
  %42 = vmatpush.bf16.msra.mxu0 0
  %43 = vmatpush.bf16.msra.mxu0 0
  %44 = vmatpush.bf16.msra.mxu0 0
  %45 = vmatpush.bf16.msra.mxu0 0
  %46 = vmatpush.bf16.msra.mxu0 0
  %47 = vmatpush.bf16.msra.mxu0 0
  %48 = vmatpush.bf16.msra.mxu0 0
  %49 = vmatpush.bf16.msra.mxu0 %v40
  %50 = vmatmul.bf16.gmra.mxu0 %v36
  %v51 = vpop.f32.mrf.mxu0
  %v52 = vadd.f32 %v32, %v51
  %v53 = vpop.f32.mrf.mxu0
  %54 = vdwg.mxu0
  %v55 = vmax.f32 %v52, 0.0
  %v56 = vpack.c.bf16 %v55, %v55
  %v57 = vld [vmem:[%s3] sm:$0xf]
  %v58 = vld [vmem:[%s3 + $0x4] sm:$0xf]
  %v59 = vld [vmem:[%s3 + $0x8] sm:$0xf]
  %v60 = vld [vmem:[%s3 + $0xc] sm:$0xf]
  %v61 = vld [vmem:[%s3 + $0x10] sm:$0xf]
  %v62 = vld [vmem:[%s3 + $0x14] sm:$0xf]
  %v63 = vld [vmem:[%s3 + $0x18] sm:$0xf]
  %v64 = vld [vmem:[%s3 + $0x1c] sm:$0xf]
  %v65 = vld [vmem:[%s3 + $0x20] sm:$0xf]
  %v66 = vld [vmem:[%s3 + $0x24] sm:$0xf]
  %v67 = vld [vmem:[%s3 + $0x28] sm:$0xf]
  %v68 = vld [vmem:[%s3 + $0x2c] sm:$0xf]
  %v69 = vld [vmem:[%s3 + $0x30] sm:$0xf]
  %v70 = vld [vmem:[%s3 + $0x34] sm:$0xf]
  %v71 = vld [vmem:[%s3 + $0x38] sm:$0xf]
  %v72 = vld [vmem:[%s3 + $0x3c] sm:$0xf]
  %v73 = vld [vmem:[%s4] sm:$0x1]
  %v75 = vperm.slane %v73, 0
  %v93 = vunpack.c.l.b16 %v57
  %v94 = vunpack.c.l.b16 %v58
  %v95 = vunpack.c.l.b16 %v59
  %v96 = vunpack.c.l.b16 %v60
  %v97 = vunpack.c.l.b16 %v61
  %v98 = vunpack.c.l.b16 %v62
  %v99 = vunpack.c.l.b16 %v63
  %v100 = vunpack.c.l.b16 %v64
  %v101 = vunpack.c.l.b16 %v65
  %v102 = vunpack.c.l.b16 %v66
  %v103 = vunpack.c.l.b16 %v67
  %v104 = vunpack.c.l.b16 %v68
  %v105 = vunpack.c.l.b16 %v69
  %v106 = vunpack.c.l.b16 %v70
  %v107 = vunpack.c.l.b16 %v71
  %v108 = vunpack.c.l.b16 %v72
  %v109 = vpack.c.b16 %v94, %v93
  %v110 = vpack.c.b16 %v96, %v95
  %v111 = vpack.c.b16 %v98, %v97
  %v112 = vpack.c.b16 %v100, %v99
  %v113 = vpack.c.b16 %v102, %v101
  %v114 = vpack.c.b16 %v104, %v103
  %v115 = vpack.c.b16 %v106, %v105
  %v116 = vpack.c.b16 %v108, %v107
  %125 = vmatpush.bf16.msra.mxu0 %v116
  %126 = vmatpush.bf16.msra.mxu0 %v115
  %127 = vmatpush.bf16.msra.mxu0 %v114
  %128 = vmatpush.bf16.msra.mxu0 %v113
  %129 = vmatpush.bf16.msra.mxu0 %v112
  %130 = vmatpush.bf16.msra.mxu0 %v111
  %131 = vmatpush.bf16.msra.mxu0 %v110
  %132 = vmatpush.bf16.msra.mxu0 %v109
  %133 = vmatmul.bf16.gmra.mxu0 %v56
  %v134 = vpop.f32.mrf.mxu0
  %v135 = vadd.f32 %v75, %v134
  %v136 = vpop.f32.mrf.mxu0
  %137 = vdwg.mxu0
  %v138 = vmax.f32 %v135, 0.0
  %v139 = vpack.c.bf16 %v138, %v138
  %v140 = vld [vmem:[%s5] sm:$0xf]
  %v141 = vld [vmem:[%s5 + $0x4] sm:$0xf]
  %v142 = vld [vmem:[%s5 + $0x8] sm:$0xf]
  %v143 = vld [vmem:[%s5 + $0xc] sm:$0xf]
  %v144 = vld [vmem:[%s5 + $0x10] sm:$0xf]
  %v145 = vld [vmem:[%s5 + $0x14] sm:$0xf]
  %v146 = vld [vmem:[%s5 + $0x18] sm:$0xf]
  %v147 = vld [vmem:[%s5 + $0x1c] sm:$0xf]
  %v148 = vld [vmem:[%s5 + $0x20] sm:$0xf]
  %v149 = vld [vmem:[%s5 + $0x24] sm:$0xf]
  %v150 = vld [vmem:[%s5 + $0x28] sm:$0xf]
  %v151 = vld [vmem:[%s5 + $0x2c] sm:$0xf]
  %v152 = vld [vmem:[%s5 + $0x30] sm:$0xf]
  %v153 = vld [vmem:[%s5 + $0x34] sm:$0xf]
  %v154 = vld [vmem:[%s5 + $0x38] sm:$0xf]
  %v155 = vld [vmem:[%s5 + $0x3c] sm:$0xf]
  %v156 = vld [vmem:[%s6] sm:$0x1]
  %v158 = vperm.slane %v156, 0
  %v176 = vunpack.c.l.b16 %v140
  %v177 = vunpack.c.l.b16 %v141
  %v178 = vunpack.c.l.b16 %v142
  %v179 = vunpack.c.l.b16 %v143
  %v180 = vunpack.c.l.b16 %v144
  %v181 = vunpack.c.l.b16 %v145
  %v182 = vunpack.c.l.b16 %v146
  %v183 = vunpack.c.l.b16 %v147
  %v184 = vunpack.c.l.b16 %v148
  %v185 = vunpack.c.l.b16 %v149
  %v186 = vunpack.c.l.b16 %v150
  %v187 = vunpack.c.l.b16 %v151
  %v188 = vunpack.c.l.b16 %v152
  %v189 = vunpack.c.l.b16 %v153
  %v190 = vunpack.c.l.b16 %v154
  %v191 = vunpack.c.l.b16 %v155
  %v192 = vpack.c.b16 %v177, %v176
  %v193 = vpack.c.b16 %v179, %v178
  %v194 = vpack.c.b16 %v181, %v180
  %v195 = vpack.c.b16 %v183, %v182
  %v196 = vpack.c.b16 %v185, %v184
  %v197 = vpack.c.b16 %v187, %v186
  %v198 = vpack.c.b16 %v189, %v188
  %v199 = vpack.c.b16 %v191, %v190
  %208 = vmatpush.bf16.msra.mxu0 %v199
  %209 = vmatpush.bf16.msra.mxu0 %v198
  %210 = vmatpush.bf16.msra.mxu0 %v197
  %211 = vmatpush.bf16.msra.mxu0 %v196
  %212 = vmatpush.bf16.msra.mxu0 %v195
  %213 = vmatpush.bf16.msra.mxu0 %v194
  %214 = vmatpush.bf16.msra.mxu0 %v193
  %215 = vmatpush.bf16.msra.mxu0 %v192
  %216 = vmatmul.bf16.gmra.mxu0 %v139
  %v217 = vpop.f32.mrf.mxu0
  %v218 = vadd.f32 %v158, %v217
  %v219 = vpop.f32.mrf.mxu0
  %220 = vdwg.mxu0
  %vm221 = vcmask 15360
  %222 = vst.msk [vmem:[%s7] sm:$0xff] %vm221, %v218
  // Predicated region
  $region30: #{generic_network_forward.1} parent=0 // pred_check
    _
  $region31: #{generic_network_forward.1} parent=0 // pred_check_branch
    %224 = sbr.rel (0) target = $region33
  $region32: #{generic_network_forward.1} parent=0 // pred_region
    _
  $region33: #{generic_network_forward.1} parent=0 // pred_fallthru
    _
  // Predicated region
  $region34: #{generic_network_forward.1} parent=0 // pred_check
    _
  $region35: #{generic_network_forward.1} parent=0 // pred_check_branch
    %226 = sbr.rel (0) target = $region37
  $region36: #{generic_network_forward.1} parent=0 // pred_region
    _
  $region37: #{generic_network_forward.1} parent=0 // pred_fallthru
    _

</llo_original>
